<compile_context>
chip_gen: v5e
topology: v5e:2x2
jax: 0.10.0
libtpu: 0.0.40
codegen_flags: <defaults>
</compile_context>

<pallas_src>
import jax
import jax.numpy as jnp
from jax.experimental import pallas as pl
from jax.experimental.pallas import tpu as pltpu


# --------------------------------------------------------------------------------------
# ChannelAttention gate (features path), block of B samples per grid step:
#   att = sigmoid(fc2(relu(fc1(avgpool(x)))) + fc2(relu(fc1(maxpool(x)))));  out = att * x
# Per-sample layout (C, HW): channels on sublanes, spatial on lanes (HW=256 lane-dense, so
# the gated output stores are unmasked vst).  All B samples' avg/max pooled vectors are
# packed into one (C, 2B) RHS so the SE MLP is 2 batched MXU dots per block.
# --------------------------------------------------------------------------------------
def _make_ca_gate_kernel(bb):
    def kernel(x_ref, w1_ref, w2_ref, o_ref):
        C = x_ref.shape[1]
        # Pack [avg_0..avg_{B-1} | max_0..max_{B-1}] into one (C, 2B) operand via
        # iota-select (pure VPU broadcasts/selects; no lane-concat needed).
        cols = jax.lax.broadcasted_iota(jnp.int32, (C, 2 * bb), 1)
        p = jnp.zeros((C, 2 * bb), jnp.float32)
        for b in range(bb):
            xb = x_ref[b]                                            # (C, HW) f32
            p = jnp.where(cols == b, jnp.mean(xb, axis=-1, keepdims=True), p)
            p = jnp.where(cols == bb + b, jnp.max(xb, axis=-1, keepdims=True), p)
        h = jnp.maximum(
            jnp.dot(w1_ref[...], p, preferred_element_type=jnp.float32), 0.0)   # (Cr, 2B)
        z = jnp.dot(w2_ref[...], h, preferred_element_type=jnp.float32)         # (C, 2B)
        att = jax.nn.sigmoid(z[:, :bb] + z[:, bb:])                              # (C, B)
        for b in range(bb):
            # att column broadcasts over the spatial lanes.
            o_ref[b] = (x_ref[b] * att[:, b:b + 1]).astype(o_ref.dtype)
    return kernel


def channel_attention_gate(x, w1, w2, block_b=8):
    """x: (N, C, H, W) NCHW;  w1: (C//16, C);  w2: (C, C//16).  Returns ca(x) * x (NCHW)."""
    N, C, H, W = x.shape
    HW = H * W
    x3 = x.reshape(N, C, HW)                     # contiguous reshape, no transpose
    bb = N if N <= block_b else block_b
    if N > block_b:
        assert block_b % 8 == 0, "batch block must be a multiple of 8 when N > block_b"
    npad = -(-N // bb) * bb
    if npad != N:
        x3 = jnp.pad(x3, ((0, npad - N), (0, 0), (0, 0)))
    out = pl.pallas_call(
        _make_ca_gate_kernel(bb),
        out_shape=jax.ShapeDtypeStruct((npad, C, HW), x.dtype),
        grid=(npad // bb,),
        in_specs=[
            pl.BlockSpec((bb, C, HW), lambda n: (n, 0, 0)),
            pl.BlockSpec(w1.shape, lambda n: (0, 0)),
            pl.BlockSpec(w2.shape, lambda n: (0, 0)),
        ],
        out_specs=pl.BlockSpec((bb, C, HW), lambda n: (n, 0, 0)),
        compiler_params=pltpu.CompilerParams(
            dimension_semantics=("parallel",)),
    )(x3, w1, w2)
    return out[:N].reshape(N, C, H, W)


# --------------------------------------------------------------------------------------
# Fused logits() head, block of B samples per grid step:
#   ca1 gate + AvgPool2d(7) + folded (last_linear -> last_linear2) 2048->4 map.
# Input is the native per-sample (C=2048, HW=49) slab (no host transpose); pooling is a
# masked lane reduction.  All pooled vectors are packed into a single (C, 2B) RHS so the
# SE MLP is 2 batched MXU dots; the folded head is one trans-A dot to (B, 4).
# Dropout == identity (eval), so folding last_linear2 @ last_linear is exact.
# --------------------------------------------------------------------------------------
def _make_logits_kernel(bb):
    def kernel(x_ref, w1_ref, w2_ref, wf_ref, b_ref, o_ref):
        C = x_ref.shape[1]
        cols = jax.lax.broadcasted_iota(jnp.int32, (C, 2 * bb), 1)
        p = jnp.zeros((C, 2 * bb), jnp.float32)
        for b in range(bb):
            xb = x_ref[b]                                            # (C, HW=49) f32
            p = jnp.where(cols == b, jnp.mean(xb, axis=-1, keepdims=True), p)
            p = jnp.where(cols == bb + b, jnp.max(xb, axis=-1, keepdims=True), p)
        pb = p.astype(w1_ref.dtype)                                  # bf16 copy for the MXU
        h = jnp.maximum(
            jnp.dot(w1_ref[...], pb, preferred_element_type=jnp.float32), 0.0)  # (Cr, 2B)
        z = jnp.dot(w2_ref[...], h.astype(w2_ref.dtype),
                    preferred_element_type=jnp.float32)                          # (C, 2B)
        att = jax.nn.sigmoid(z[:, :bb] + z[:, bb:])                               # (C, B)
        gp = p[:, :bb] * att                       # (C, B) f32 == AvgPool2d(7)(ca1(x) * x)
        # Folded head: y[b, :] = gp[:, b] @ Wf.T + bf ; contract sublane dim of both.
        y = jax.lax.dot_general(gp, wf_ref[...], (((0,), (0,)), ((), ())),
                                preferred_element_type=jnp.float32) + b_ref[...]  # (B, 4)
        o_ref[...] = y.astype(o_ref.dtype)
    return kernel


def prepare_logits_params(params):
    """Host-side, once per model: fold last_linear2 ∘ (eval-dropout) ∘ last_linear into a
    single 2048->4 affine map and keep the SE weights in their kernel orientation."""
    l1w = params["l1_w"].astype(jnp.float32)        # (1000, 2048)
    l1b = params["l1_b"].astype(jnp.float32)        # (1000,)
    l2w = params["l2_w"].astype(jnp.float32)        # (4, 1000)
    l2b = params["l2_b"].astype(jnp.float32)        # (4,)
    wf_t = jnp.transpose(l2w @ l1w)                 # (2048, 4) f32 folded weight
    bf = (l2w @ l1b + l2b).reshape(1, 4)            # (1, 4)    f32 folded bias
    return {
        "w1": params["ca1_w1"],                     # (128, 2048) bf16, dot LHS
        "w2": params["ca1_w2"],                     # (2048, 128) bf16, dot LHS
        "wf_t": wf_t,
        "bf": bf,
    }


def attention_senet_logits(feat, lparams, block_b=8):
    """feat: (N, 2048, 7, 7) trunk features (NCHW).  lparams: prepare_logits_params(...).
    Returns (N, 4) logits."""
    N, C, H, W = feat.shape
    assert (H, W) == (7, 7), "AvgPool2d(7, stride=1) head expects a 7x7 feature map"
    HW = H * W
    x = feat.reshape(N, C, HW)                      # contiguous reshape, NO transpose
    bb = N if N <= block_b else block_b
    if N > block_b:
        assert block_b % 8 == 0, "batch block must be a multiple of 8 when N > block_b"
    npad = -(-N // bb) * bb
    if npad != N:
        x = jnp.pad(x, ((0, npad - N), (0, 0), (0, 0)))

    w1 = lparams["w1"]
    w2 = lparams["w2"]
    wf = lparams["wf_t"]
    bf = lparams["bf"]

    out = pl.pallas_call(
        _make_logits_kernel(bb),
        out_shape=jax.ShapeDtypeStruct((npad, 4), jnp.float32),
        grid=(npad // bb,),
        in_specs=[
            pl.BlockSpec((bb, C, HW), lambda n: (n, 0, 0)),
            pl.BlockSpec(w1.shape, lambda n: (0, 0)),
            pl.BlockSpec(w2.shape, lambda n: (0, 0)),
            pl.BlockSpec(wf.shape, lambda n: (0, 0)),
            pl.BlockSpec(bf.shape, lambda n: (0, 0)),
        ],
        out_specs=pl.BlockSpec((bb, 4), lambda n: (n, 0)),
        compiler_params=pltpu.CompilerParams(
            dimension_semantics=("parallel",),
            # ~25 MiB live at B=8 (2x 8 MiB input buffers + ~2 MiB weights + temporaries);
            # 40 MiB leaves headroom everywhere, incl. v7x's 64 MiB VMEM.
            vmem_limit_bytes=40 * 1024 * 1024),
    )(x, w1, w2, wf, bf)
    return out[:N]


# --------------------------------------------------------------------------------------
# Pure-JAX references (for correctness checking only)
# --------------------------------------------------------------------------------------
def _ref_gate(x, w1, w2):
    avg = x.mean(axis=(2, 3))                                # (N, C)
    mx = x.max(axis=(2, 3))                                  # (N, C)
    f = lambda v: jnp.maximum(v @ w1.T, 0.0) @ w2.T
    att = jax.nn.sigmoid(f(avg) + f(mx))
    return x * att[:, :, None, None]


def _bf16_round(x):
    return x.astype(jnp.bfloat16).astype(jnp.float32)


def _ref_logits(feat, p):
    # Mirrors the kernel's mixed precision on the SE MLP (bf16 operands, f32 accumulate);
    # the 2048->1000->4 head is the UNfolded f32 path, validating the host-side fold.
    w1 = p["ca1_w1"].astype(jnp.float32)
    w2 = p["ca1_w2"].astype(jnp.float32)
    avg = feat.mean(axis=(2, 3))                             # (N, 2048)
    mx = feat.max(axis=(2, 3))                               # (N, 2048)
    f = lambda v: jnp.maximum(_bf16_round(v) @ w1.T, 0.0)    # relu(fc1(.))
    z = _bf16_round(f(avg)) @ w2.T + _bf16_round(f(mx)) @ w2.T
    att = jax.nn.sigmoid(z)
    gp = avg * att                                           # avg_pool(ca1(x) * x)
    y1 = gp @ p["l1_w"].T + p["l1_b"]
    return y1 @ p["l2_w"].T + p["l2_b"]


# --------------------------------------------------------------------------------------
# Deterministic parameter construction (shapes from __init__; synthetic values)
# --------------------------------------------------------------------------------------
def init_params(key):
    ks = jax.random.split(key, 8)
    p = {}
    # ChannelAttention(64): fc1 Conv2d(64, 4, 1), fc2 Conv2d(4, 64, 1)  — tiny, keep f32.
    p["ca_w1"] = jax.random.normal(ks[0], (4, 64), jnp.float32) * (2.0 / 4) ** 0.5
    p["ca_w2"] = jax.random.normal(ks[1], (64, 4), jnp.float32) * (2.0 / 64) ** 0.5
    # ChannelAttention(2048): big SE weights stored in bf16 (f32 accumulation in-kernel).
    p["ca1_w1"] = (jax.random.normal(ks[2], (128, 2048), jnp.float32)
                   * (2.0 / 128) ** 0.5).astype(jnp.bfloat16)
    p["ca1_w2"] = (jax.random.normal(ks[3], (2048, 128), jnp.float32)
                   * (2.0 / 2048) ** 0.5).astype(jnp.bfloat16)
    # last_linear / last_linear2 stay f32: they are folded host-side, never shipped raw.
    p["l1_w"] = jax.random.normal(ks[4], (1000, 2048), jnp.float32) * (1.0 / 2048) ** 0.5
    p["l1_b"] = jax.random.normal(ks[5], (1000,), jnp.float32) * (1.0 / 2048) ** 0.5
    # last_linear2: w ~ N(0, 0.01), b = 0 (as in __init__).
    p["l2_w"] = jax.random.normal(ks[6], (4, 1000), jnp.float32) * 0.01
    p["l2_b"] = jnp.zeros((4,), jnp.float32)
    return p


if __name__ == "__main__":
    key = jax.random.PRNGKey(0)
    k_x1, k_x2, k_p = jax.random.split(key, 3)
    params = init_params(k_p)
    logits_params = prepare_logits_params(params)            # one-time host-side prep

    # `x = self.ca(x) * x` in features(): SE gate on a 64-channel map.
    x_small = jax.random.normal(k_x1, (2, 64, 16, 16), jnp.float32)
    # Trunk output consumed by logits(): (N, 2048, 7, 7) (512 * expansion=4 channels).
    x_feat = jax.random.normal(k_x2, (2, 2048, 7, 7), jnp.float32)

    y_gate = jax.block_until_ready(
        channel_attention_gate(x_small, params["ca_w1"], params["ca_w2"]))
    y_logits = jax.block_until_ready(attention_senet_logits(x_feat, logits_params))

    assert y_gate.shape == (2, 64, 16, 16)
    assert y_logits.shape == (2, 4)
    assert jnp.allclose(y_gate, _ref_gate(x_small, params["ca_w1"], params["ca_w2"]),
                        rtol=1e-3, atol=1e-3)
    assert jnp.allclose(y_logits, _ref_logits(x_feat, params), rtol=2e-3, atol=2e-3)

    # All-negative inputs exercise the max-pool over the lane-padded (49 -> 128) axis.
    x_small_neg = -jnp.abs(x_small) - 1.0
    x_feat_neg = -jnp.abs(x_feat) - 1.0
    y_gate_n = jax.block_until_ready(
        channel_attention_gate(x_small_neg, params["ca_w1"], params["ca_w2"]))
    y_logits_n = jax.block_until_ready(attention_senet_logits(x_feat_neg, logits_params))
    assert jnp.allclose(y_gate_n, _ref_gate(x_small_neg, params["ca_w1"], params["ca_w2"]),
                        rtol=1e-3, atol=1e-3)
    assert jnp.allclose(y_logits_n, _ref_logits(x_feat_neg, params), rtol=2e-3, atol=2e-3)

    print("KERNEL_OK")
</pallas_src>

<mosaic_0001>
module attributes {stable_mosaic.version = 11 : i64} {
  func.func @kernel(%arg0: i32, %arg1: memref<2x64x256xf32, #tpu.memory_space<vmem>>, %arg2: memref<4x64xf32, #tpu.memory_space<vmem>>, %arg3: memref<64x4xf32, #tpu.memory_space<vmem>>, %arg4: memref<2x64x256xf32, #tpu.memory_space<vmem>>) attributes {dimension_semantics = [#tpu.dimension_semantics<parallel>], iteration_bounds = array<i64: 1>, scalar_prefetch = 0 : i64, scratch_operands = 0 : i64, tpu.core_type = #tpu.core_type<tc>, window_params = [{transform_indices = @transform_0, window_bounds = array<i64: 2, 64, 256>}, {pipeline_mode = #tpu.pipeline_mode<synchronous>, transform_indices = @transform_1, window_bounds = array<i64: 4, 64>}, {pipeline_mode = #tpu.pipeline_mode<synchronous>, transform_indices = @transform_2, window_bounds = array<i64: 64, 4>}, {transform_indices = @transform_3, window_bounds = array<i64: 2, 64, 256>}]} {
    %0 = tpu.iota {dimensions = array<i32: 1>} : vector<64x4xi32>
    %cst = arith.constant 0.000000e+00 : f32
    %1 = vector.broadcast %cst : f32 to vector<64x4xf32>
    %c0 = arith.constant 0 : index
    %c0_0 = arith.constant 0 : index
    %c0_1 = arith.constant 0 : index
    %2 = vector.load %arg1[%c0, %c0_0, %c0_1] : memref<2x64x256xf32, #tpu.memory_space<vmem>>, vector<1x64x256xf32>
    %3 = vector.shape_cast %2 : vector<1x64x256xf32> to vector<64x256xf32>
    %c0_i32 = arith.constant 0 : i32
    %4 = vector.broadcast %c0_i32 : i32 to vector<64x4xi32>
    %5 = arith.cmpi eq, %0, %4 : vector<64x4xi32>
    %cst_2 = arith.constant dense<0.000000e+00> : vector<64xf32>
    %6 = vector.multi_reduction <add>, %3, %cst_2 [1] : vector<64x256xf32> to vector<64xf32>
    %7 = vector.shape_cast %6 : vector<64xf32> to vector<64x1xf32>
    %cst_3 = arith.constant 2.560000e+02 : f32
    %8 = vector.broadcast %cst_3 : f32 to vector<64x1xf32>
    %9 = arith.divf %7, %8 : vector<64x1xf32>
    %10 = vector.shape_cast %9 : vector<64x1xf32> to vector<64x1xf32>
    %11 = vector.broadcast %10 : vector<64x1xf32> to vector<64x4xf32>
    %12 = arith.select %5, %11, %1 : vector<64x4xi1>, vector<64x4xf32>
    %c2_i32 = arith.constant 2 : i32
    %13 = vector.broadcast %c2_i32 : i32 to vector<64x4xi32>
    %14 = arith.cmpi eq, %0, %13 : vector<64x4xi32>
    %cst_4 = arith.constant dense<0xFF800000> : vector<64xf32>
    %15 = vector.multi_reduction <maximumf>, %3, %cst_4 [1] : vector<64x256xf32> to vector<64xf32>
    %16 = vector.shape_cast %15 : vector<64xf32> to vector<64x1xf32>
    %17 = vector.shape_cast %16 : vector<64x1xf32> to vector<64x1xf32>
    %18 = vector.broadcast %17 : vector<64x1xf32> to vector<64x4xf32>
    %19 = arith.select %14, %18, %12 : vector<64x4xi1>, vector<64x4xf32>
    %c1 = arith.constant 1 : index
    %c0_5 = arith.constant 0 : index
    %c0_6 = arith.constant 0 : index
    %20 = vector.load %arg1[%c1, %c0_5, %c0_6] : memref<2x64x256xf32, #tpu.memory_space<vmem>>, vector<1x64x256xf32>
    %21 = vector.shape_cast %20 : vector<1x64x256xf32> to vector<64x256xf32>
    %c1_i32 = arith.constant 1 : i32
    %22 = vector.broadcast %c1_i32 : i32 to vector<64x4xi32>
    %23 = arith.cmpi eq, %0, %22 : vector<64x4xi32>
    %cst_7 = arith.constant dense<0.000000e+00> : vector<64xf32>
    %24 = vector.multi_reduction <add>, %21, %cst_7 [1] : vector<64x256xf32> to vector<64xf32>
    %25 = vector.shape_cast %24 : vector<64xf32> to vector<64x1xf32>
    %cst_8 = arith.constant 2.560000e+02 : f32
    %26 = vector.broadcast %cst_8 : f32 to vector<64x1xf32>
    %27 = arith.divf %25, %26 : vector<64x1xf32>
    %28 = vector.shape_cast %27 : vector<64x1xf32> to vector<64x1xf32>
    %29 = vector.broadcast %28 : vector<64x1xf32> to vector<64x4xf32>
    %30 = arith.select %23, %29, %19 : vector<64x4xi1>, vector<64x4xf32>
    %c3_i32 = arith.constant 3 : i32
    %31 = vector.broadcast %c3_i32 : i32 to vector<64x4xi32>
    %32 = arith.cmpi eq, %0, %31 : vector<64x4xi32>
    %cst_9 = arith.constant dense<0xFF800000> : vector<64xf32>
    %33 = vector.multi_reduction <maximumf>, %21, %cst_9 [1] : vector<64x256xf32> to vector<64xf32>
    %34 = vector.shape_cast %33 : vector<64xf32> to vector<64x1xf32>
    %35 = vector.shape_cast %34 : vector<64x1xf32> to vector<64x1xf32>
    %36 = vector.broadcast %35 : vector<64x1xf32> to vector<64x4xf32>
    %37 = arith.select %32, %36, %30 : vector<64x4xi1>, vector<64x4xf32>
    %c0_10 = arith.constant 0 : index
    %c0_11 = arith.constant 0 : index
    %38 = vector.load %arg2[%c0_10, %c0_11] : memref<4x64xf32, #tpu.memory_space<vmem>>, vector<4x64xf32>
    %cst_12 = arith.constant dense<0.000000e+00> : vector<4x4xf32>
    %39 = tpu.matmul %38, %37, %cst_12 {dimension_numbers = #tpu.dot_dimension_numbers<[1], [0], [0], [1], [0, 0, 1, 1], [], []>} : vector<4x64xf32>, vector<64x4xf32>, vector<4x4xf32> -> vector<4x4xf32>
    %cst_13 = arith.constant 0.000000e+00 : f32
    %40 = vector.broadcast %cst_13 : f32 to vector<4x4xf32>
    %41 = arith.maximumf %39, %40 : vector<4x4xf32>
    %c0_14 = arith.constant 0 : index
    %c0_15 = arith.constant 0 : index
    %42 = vector.load %arg3[%c0_14, %c0_15] : memref<64x4xf32, #tpu.memory_space<vmem>>, vector<64x4xf32>
    %cst_16 = arith.constant dense<0.000000e+00> : vector<64x4xf32>
    %43 = tpu.matmul %42, %41, %cst_16 {dimension_numbers = #tpu.dot_dimension_numbers<[1], [0], [0], [1], [0, 0, 1, 1], [], []>} : vector<64x4xf32>, vector<4x4xf32>, vector<64x4xf32> -> vector<64x4xf32>
    %44 = vector.extract_strided_slice %43 {offsets = [0, 0], sizes = [64, 2], strides = [1, 1]} : vector<64x4xf32> to vector<64x2xf32>
    %45 = vector.extract_strided_slice %43 {offsets = [0, 2], sizes = [64, 2], strides = [1, 1]} : vector<64x4xf32> to vector<64x2xf32>
    %46 = arith.addf %44, %45 : vector<64x2xf32>
    %47 = arith.negf %46 : vector<64x2xf32>
    %48 = math.exp %47 : vector<64x2xf32>
    %cst_17 = arith.constant 1.000000e+00 : f32
    %49 = vector.broadcast %cst_17 : f32 to vector<64x2xf32>
    %50 = arith.addf %49, %48 : vector<64x2xf32>
    %51 = arith.divf %49, %50 : vector<64x2xf32>
    %c0_18 = arith.constant 0 : index
    %c0_19 = arith.constant 0 : index
    %c0_20 = arith.constant 0 : index
    %52 = vector.load %arg1[%c0_18, %c0_19, %c0_20] : memref<2x64x256xf32, #tpu.memory_space<vmem>>, vector<1x64x256xf32>
    %53 = vector.shape_cast %52 : vector<1x64x256xf32> to vector<64x256xf32>
    %54 = vector.extract_strided_slice %51 {offsets = [0, 0], sizes = [64, 1], strides = [1, 1]} : vector<64x2xf32> to vector<64x1xf32>
    %55 = vector.broadcast %54 : vector<64x1xf32> to vector<64x256xf32>
    %56 = arith.mulf %53, %55 : vector<64x256xf32>
    %c0_21 = arith.constant 0 : index
    %c0_22 = arith.constant 0 : index
    %c0_23 = arith.constant 0 : index
    %57 = vector.load %arg4[%c0_21, %c0_22, %c0_23] : memref<2x64x256xf32, #tpu.memory_space<vmem>>, vector<1x64x256xf32>
    %58 = vector.shape_cast %57 : vector<1x64x256xf32> to vector<64x256xf32>
    %59 = vector.shape_cast %56 : vector<64x256xf32> to vector<1x64x256xf32>
    tpu.vector_store %arg4[%c0_21, %c0_22, %c0_23], %59 {strides = array<i32>} : memref<2x64x256xf32, #tpu.memory_space<vmem>>, vector<1x64x256xf32>,
    %c1_24 = arith.constant 1 : index
    %c0_25 = arith.constant 0 : index
    %c0_26 = arith.constant 0 : index
    %60 = vector.load %arg1[%c1_24, %c0_25, %c0_26] : memref<2x64x256xf32, #tpu.memory_space<vmem>>, vector<1x64x256xf32>
    %61 = vector.shape_cast %60 : vector<1x64x256xf32> to vector<64x256xf32>
    %62 = vector.extract_strided_slice %51 {offsets = [0, 1], sizes = [64, 1], strides = [1, 1]} : vector<64x2xf32> to vector<64x1xf32>
    %63 = vector.broadcast %62 : vector<64x1xf32> to vector<64x256xf32>
    %64 = arith.mulf %61, %63 : vector<64x256xf32>
    %c1_27 = arith.constant 1 : index
    %c0_28 = arith.constant 0 : index
    %c0_29 = arith.constant 0 : index
    %65 = vector.load %arg4[%c1_27, %c0_28, %c0_29] : memref<2x64x256xf32, #tpu.memory_space<vmem>>, vector<1x64x256xf32>
    %66 = vector.shape_cast %65 : vector<1x64x256xf32> to vector<64x256xf32>
    %67 = vector.shape_cast %64 : vector<64x256xf32> to vector<1x64x256xf32>
    tpu.vector_store %arg4[%c1_27, %c0_28, %c0_29], %67 {strides = array<i32>} : memref<2x64x256xf32, #tpu.memory_space<vmem>>, vector<1x64x256xf32>,
    return
  }
  func.func @transform_0(%arg0: i32) -> (i32, i32, i32) {
    %c0_i32 = arith.constant 0 : i32
    %c0_i32_0 = arith.constant 0 : i32
    %c0_i32_1 = arith.constant 0 : i32
    return %arg0, %c0_i32, %c0_i32_0 : i32, i32, i32
  }
  func.func @transform_1(%arg0: i32) -> (i32, i32) {
    %c0_i32 = arith.constant 0 : i32
    %c0_i32_0 = arith.constant 0 : i32
    %c0_i32_1 = arith.constant 0 : i32
    return %c0_i32, %c0_i32_0 : i32, i32
  }
  func.func @transform_2(%arg0: i32) -> (i32, i32) {
    %c0_i32 = arith.constant 0 : i32
    %c0_i32_0 = arith.constant 0 : i32
    %c0_i32_1 = arith.constant 0 : i32
    return %c0_i32, %c0_i32_0 : i32, i32
  }
  func.func @transform_3(%arg0: i32) -> (i32, i32, i32) {
    %c0_i32 = arith.constant 0 : i32
    %c0_i32_0 = arith.constant 0 : i32
    %c0_i32_1 = arith.constant 0 : i32
    return %arg0, %c0_i32, %c0_i32_0 : i32, i32, i32
  }
}

</mosaic_0001>

<llo_original>
// kernel: tpu_custom_call.1
$region0: #{tpu_custom_call.1}
  #allocation0 [shape = 'u32[]', space=smem, size = 0x4, offset = 0x4, fixed_abs, tag = 'smem constant byte address 0x4 - core index']
  #allocation1 [shape = 'u32[72,128]{1,0:T(1,128)}', space=vmem, size = 0x9000, scoped, tag = 'internal scratch']
  %s0 = inlined_call_operand.hbm [shape: f32[2,64,256], index: 0, kind: input, shape index: {}]
  %s1 = inlined_call_operand.vmem [shape: f32[4,64], index: 1, kind: input, shape index: {}]
  %s2 = inlined_call_operand.vmem [shape: f32[64,4], index: 2, kind: input, shape index: {}]
  %s3 = inlined_call_operand.hbm [shape: f32[2,64,256], index: 3, kind: output, shape index: {}]
  %s4 = sld [smem:[#allocation0]]
  $region26: #{tpu_custom_call.1} parent=0
    _
  %s6 = ssub.s32 1, %s4
  %s7 = scalar_select 0, %s6, %s4
  $region1: #{tpu_custom_call.1} parent=0
    #allocation2 [shape = 'u8[131072]{0}', space=vmem, size = 0x20000, scoped, tag = 'input window, operand 0, single buffered']
    #allocation3 [shape = 's32[1]{0}', space=sflag, size = 0x4, scoped, tag = 'scoped memory for tpu_custom_call.1']
    #allocation4 [shape = 's32[1]{0}', space=sflag, size = 0x4, scoped, tag = 'scoped memory for tpu_custom_call.1']
    #allocation5 [shape = 'u8[131072]{0}', space=vmem, size = 0x20000, scoped, tag = 'output window, operand 0, single buffered']
    %8 = vsyncpa [#allocation3], 0
    %9 = vsyncpa [#allocation4], 0
    // Predicated region
    $region2: #{tpu_custom_call.1} parent=1 // pred_check
      _
    $region3: #{tpu_custom_call.1} parent=1 // pred_check_branch
      %11 = sbr.rel (0) target = $region5
    $region4: #{tpu_custom_call.1} parent=1 // pred_region
      %13 = vsyncadd [#allocation3], 0
      %s14 = sshll.u32 %s0, 4
      %s15 = int_to_ptr.hbm [resolvable:$true] %s14
      %s16 = sshll.u32 [#allocation2], 4
      %s17 = int_to_ptr.vmem [resolvable:$true] %s16
      %22 = dma.hbm_to_vmem [thread:$0]  %s15, 4096, %s17, [#allocation3], 256, 256, 16
    $region5: #{tpu_custom_call.1} parent=1 // pred_fallthru
      _
    // Predicated region
    $region6: #{tpu_custom_call.1} parent=1 // pred_check
      _
    $region7: #{tpu_custom_call.1} parent=1 // pred_check_branch
      %24 = sbr.rel (0) target = $region9
    $region8: #{tpu_custom_call.1} parent=1 // pred_region
      _
    $region9: #{tpu_custom_call.1} parent=1 // pred_fallthru
      _
    // Predicated region
    $region10: #{tpu_custom_call.1} parent=1 // pred_check
      _
    $region11: #{tpu_custom_call.1} parent=1 // pred_check_branch
      %26 = sbr.rel (0) target = $region13
    $region12: #{tpu_custom_call.1} parent=1 // pred_region
      _
    $region13: #{tpu_custom_call.1} parent=1 // pred_fallthru
      _
    // Predicated region
    $region14: #{tpu_custom_call.1} parent=1 // pred_check
      _
    $region15: #{tpu_custom_call.1} parent=1 // pred_check_branch
      %28 = sbr.rel (0) target = $region17
    $region16: #{tpu_custom_call.1} parent=1 // pred_region
      %30 = dma.done [#allocation3], 4096
    $region17: #{tpu_custom_call.1} parent=1 // pred_fallthru
      _
    %v31 = vlaneseq
    %v32 = vand.u32 %v31, 127
    %v33 = vld [vmem:[#allocation2] sm:$0xff]
    %v34 = vld [vmem:[#allocation2 + $0x8] sm:$0xff]
    %v35 = vld [vmem:[#allocation2 + $0x10] sm:$0xff]
    %v36 = vld [vmem:[#allocation2 + $0x18] sm:$0xff]
    %v37 = vld [vmem:[#allocation2 + $0x20] sm:$0xff]
    %v38 = vld [vmem:[#allocation2 + $0x28] sm:$0xff]
    %v39 = vld [vmem:[#allocation2 + $0x30] sm:$0xff]
    %v40 = vld [vmem:[#allocation2 + $0x38] sm:$0xff]
    %v41 = vld [vmem:[#allocation2 + $0x40] sm:$0xff]
    %v42 = vld [vmem:[#allocation2 + $0x48] sm:$0xff]
    %v43 = vld [vmem:[#allocation2 + $0x50] sm:$0xff]
    %v44 = vld [vmem:[#allocation2 + $0x58] sm:$0xff]
    %v45 = vld [vmem:[#allocation2 + $0x60] sm:$0xff]
    %v46 = vld [vmem:[#allocation2 + $0x68] sm:$0xff]
    %v47 = vld [vmem:[#allocation2 + $0x70] sm:$0xff]
    %v48 = vld [vmem:[#allocation2 + $0x78] sm:$0xff]
    %vm49 = vcmp.eq.s32.totalorder %v32, 0
    %v50 = vadd.f32 %v33, %v34
    %51 = vadd.xlane.f32.xlu0 %v50
    %v52 = vpop.xlane.xlu0 %51
    %v53 = vadd.f32 %v35, %v36
    %54 = vadd.xlane.f32.xlu0 %v53
    %v55 = vpop.xlane.xlu0 %54
    %v56 = vadd.f32 %v37, %v38
    %57 = vadd.xlane.f32.xlu0 %v56
    %v58 = vpop.xlane.xlu0 %57
    %v59 = vadd.f32 %v39, %v40
    %60 = vadd.xlane.f32.xlu0 %v59
    %v61 = vpop.xlane.xlu0 %60
    %v62 = vadd.f32 %v41, %v42
    %63 = vadd.xlane.f32.xlu0 %v62
    %v64 = vpop.xlane.xlu0 %63
    %v65 = vadd.f32 %v43, %v44
    %66 = vadd.xlane.f32.xlu0 %v65
    %v67 = vpop.xlane.xlu0 %66
    %v68 = vadd.f32 %v45, %v46
    %69 = vadd.xlane.f32.xlu0 %v68
    %v70 = vpop.xlane.xlu0 %69
    %v71 = vadd.f32 %v47, %v48
    %72 = vadd.xlane.f32.xlu0 %v71
    %v73 = vpop.xlane.xlu0 %72
    %v74 = vrcp.pop 256.0
    %v75 = vmul.f32 256.0, %v74
    %v76 = vsub.f32 1.0, %v75
    %v77 = vmul.f32 %v74, %v76
    %v78 = vadd.f32 %v74, %v77
    %vm79 = vweird.f32 %v74
    %v80 = vsel %vm79, %v74, %v78
    %v81 = vmul.f32 %v52, %v80
    %v82 = vmul.f32 %v55, %v80
    %v83 = vmul.f32 %v58, %v80
    %v84 = vmul.f32 %v61, %v80
    %v85 = vmul.f32 %v64, %v80
    %v86 = vmul.f32 %v67, %v80
    %v87 = vmul.f32 %v70, %v80
    %v88 = vmul.f32 %v73, %v80
    %v89 = vsel %vm49, %v81, 0.0
    %v90 = vsel %vm49, %v82, 0.0
    %v91 = vsel %vm49, %v83, 0.0
    %v92 = vsel %vm49, %v84, 0.0
    %v93 = vsel %vm49, %v85, 0.0
    %v94 = vsel %vm49, %v86, 0.0
    %v95 = vsel %vm49, %v87, 0.0
    %v96 = vsel %vm49, %v88, 0.0
    %vm97 = vcmp.eq.s32.totalorder %v32, 2
    %v98 = vmax.f32 %v33, %v34
    %99 = vmax.xlane.f32.xlu0 %v98
    %v100 = vpop.xlane.xlu0 %99
    %v101 = vmax.f32 %v35, %v36
    %102 = vmax.xlane.f32.xlu0 %v101
    %v103 = vpop.xlane.xlu0 %102
    %v104 = vmax.f32 %v37, %v38
    %105 = vmax.xlane.f32.xlu0 %v104
    %v106 = vpop.xlane.xlu0 %105
    %v107 = vmax.f32 %v39, %v40
    %108 = vmax.xlane.f32.xlu0 %v107
    %v109 = vpop.xlane.xlu0 %108
    %v110 = vmax.f32 %v41, %v42
    %111 = vmax.xlane.f32.xlu0 %v110
    %v112 = vpop.xlane.xlu0 %111
    %v113 = vmax.f32 %v43, %v44
    %114 = vmax.xlane.f32.xlu0 %v113
    %v115 = vpop.xlane.xlu0 %114
    %v116 = vmax.f32 %v45, %v46
    %117 = vmax.xlane.f32.xlu0 %v116
    %v118 = vpop.xlane.xlu0 %117
    %v119 = vmax.f32 %v47, %v48
    %120 = vmax.xlane.f32.xlu0 %v119
    %v121 = vpop.xlane.xlu0 %120
    %v122 = vsel %vm97, %v100, %v89
    %v123 = vsel %vm97, %v103, %v90
    %v124 = vsel %vm97, %v106, %v91
    %v125 = vsel %vm97, %v109, %v92
    %v126 = vsel %vm97, %v112, %v93
    %v127 = vsel %vm97, %v115, %v94
    %v128 = vsel %vm97, %v118, %v95
    %v129 = vsel %vm97, %v121, %v96
    %s130 = scalar_lea.vmem [#allocation2], 128
    %v131 = vld [vmem:[%s130] sm:$0xff]
    %v132 = vld [vmem:[%s130 + $0x8] sm:$0xff]
    %v133 = vld [vmem:[%s130 + $0x10] sm:$0xff]
    %v134 = vld [vmem:[%s130 + $0x18] sm:$0xff]
    %v135 = vld [vmem:[%s130 + $0x20] sm:$0xff]
    %v136 = vld [vmem:[%s130 + $0x28] sm:$0xff]
    %v137 = vld [vmem:[%s130 + $0x30] sm:$0xff]
    %v138 = vld [vmem:[%s130 + $0x38] sm:$0xff]
    %v139 = vld [vmem:[%s130 + $0x40] sm:$0xff]
    %v140 = vld [vmem:[%s130 + $0x48] sm:$0xff]
    %v141 = vld [vmem:[%s130 + $0x50] sm:$0xff]
    %v142 = vld [vmem:[%s130 + $0x58] sm:$0xff]
    %v143 = vld [vmem:[%s130 + $0x60] sm:$0xff]
    %v144 = vld [vmem:[%s130 + $0x68] sm:$0xff]
    %v145 = vld [vmem:[%s130 + $0x70] sm:$0xff]
    %v146 = vld [vmem:[%s130 + $0x78] sm:$0xff]
    %vm147 = vcmp.eq.s32.totalorder %v32, 1
    %v148 = vadd.f32 %v131, %v132
    %149 = vadd.xlane.f32.xlu0 %v148
    %v150 = vpop.xlane.xlu0 %149
    %v151 = vadd.f32 %v133, %v134
    %152 = vadd.xlane.f32.xlu0 %v151
    %v153 = vpop.xlane.xlu0 %152
    %v154 = vadd.f32 %v135, %v136
    %155 = vadd.xlane.f32.xlu0 %v154
    %v156 = vpop.xlane.xlu0 %155
    %v157 = vadd.f32 %v137, %v138
    %158 = vadd.xlane.f32.xlu0 %v157
    %v159 = vpop.xlane.xlu0 %158
    %v160 = vadd.f32 %v139, %v140
    %161 = vadd.xlane.f32.xlu0 %v160
    %v162 = vpop.xlane.xlu0 %161
    %v163 = vadd.f32 %v141, %v142
    %164 = vadd.xlane.f32.xlu0 %v163
    %v165 = vpop.xlane.xlu0 %164
    %v166 = vadd.f32 %v143, %v144
    %167 = vadd.xlane.f32.xlu0 %v166
    %v168 = vpop.xlane.xlu0 %167
    %v169 = vadd.f32 %v145, %v146
    %170 = vadd.xlane.f32.xlu0 %v169
    %v171 = vpop.xlane.xlu0 %170
    %v172 = vmul.f32 %v150, %v80
    %v173 = vmul.f32 %v153, %v80
    %v174 = vmul.f32 %v156, %v80
    %v175 = vmul.f32 %v159, %v80
    %v176 = vmul.f32 %v162, %v80
    %v177 = vmul.f32 %v165, %v80
    %v178 = vmul.f32 %v168, %v80
    %v179 = vmul.f32 %v171, %v80
    %v180 = vsel %vm147, %v172, %v122
    %v181 = vsel %vm147, %v173, %v123
    %v182 = vsel %vm147, %v174, %v124
    %v183 = vsel %vm147, %v175, %v125
    %v184 = vsel %vm147, %v176, %v126
    %v185 = vsel %vm147, %v177, %v127
    %v186 = vsel %vm147, %v178, %v128
    %v187 = vsel %vm147, %v179, %v129
    %vm188 = vcmp.eq.s32.totalorder %v32, 3
    %v189 = vmax.f32 %v131, %v132
    %190 = vmax.xlane.f32.xlu0 %v189
    %v191 = vpop.xlane.xlu0 %190
    %v192 = vmax.f32 %v133, %v134
    %193 = vmax.xlane.f32.xlu0 %v192
    %v194 = vpop.xlane.xlu0 %193
    %v195 = vmax.f32 %v135, %v136
    %196 = vmax.xlane.f32.xlu0 %v195
    %v197 = vpop.xlane.xlu0 %196
    %v198 = vmax.f32 %v137, %v138
    %199 = vmax.xlane.f32.xlu0 %v198
    %v200 = vpop.xlane.xlu0 %199
    %v201 = vmax.f32 %v139, %v140
    %202 = vmax.xlane.f32.xlu0 %v201
    %v203 = vpop.xlane.xlu0 %202
    %v204 = vmax.f32 %v141, %v142
    %205 = vmax.xlane.f32.xlu0 %v204
    %v206 = vpop.xlane.xlu0 %205
    %v207 = vmax.f32 %v143, %v144
    %208 = vmax.xlane.f32.xlu0 %v207
    %v209 = vpop.xlane.xlu0 %208
    %v210 = vmax.f32 %v145, %v146
    %211 = vmax.xlane.f32.xlu0 %v210
    %v212 = vpop.xlane.xlu0 %211
    %v213 = vsel %vm188, %v191, %v180
    %v214 = vsel %vm188, %v194, %v181
    %v215 = vsel %vm188, %v197, %v182
    %v216 = vsel %vm188, %v200, %v183
    %v217 = vsel %vm188, %v203, %v184
    %v218 = vsel %vm188, %v206, %v185
    %v219 = vsel %vm188, %v209, %v186
    %v220 = vsel %vm188, %v212, %v187
    %v221 = vld [vmem:[%s1] sm:$0xf]
    %vm222 = vcmask 523264
    %v224 = vsel %vm222, %v221, 0
    %226 = vmatpush.msra.mxu0 0.0
    %227 = vmatpush.msra.mxu0 0.0
    %228 = vmatpush.msra.mxu0 0.0
    %229 = vmatpush.msra.mxu0 0.0
    %230 = vmatpush.msra.mxu0 0.0
    %231 = vmatpush.msra.mxu0 0.0
    %232 = vmatpush.msra.mxu0 0.0
    %233 = vmatpush.msra.mxu0 0.0
    %234 = vmatpush.msra.mxu0 %v220
    %235 = vmatpush.msra.mxu0 %v219
    %236 = vmatpush.msra.mxu0 %v218
    %237 = vmatpush.msra.mxu0 %v217
    %238 = vmatpush.msra.mxu0 %v216
    %239 = vmatpush.msra.mxu0 %v215
    %240 = vmatpush.msra.mxu0 %v214
    %241 = vmatpush.msra.mxu0 %v213
    %242 = vmatmul.f32.gmra.mxu0 %v224
    %v243 = vpop.f32.mrf.mxu0
    %v244 = vadd.f32 0.0, %v243
    %245 = vdwg.mxu0
    %v246 = vmax.f32 %v244, 0.0
    %v247 = vld [vmem:[%s2] sm:$0xff]
    %v248 = vld [vmem:[%s2 + $0x8] sm:$0xff]
    %v249 = vld [vmem:[%s2 + $0x10] sm:$0xff]
    %v250 = vld [vmem:[%s2 + $0x18] sm:$0xff]
    %v251 = vld [vmem:[%s2 + $0x20] sm:$0xff]
    %v252 = vld [vmem:[%s2 + $0x28] sm:$0xff]
    %v253 = vld [vmem:[%s2 + $0x30] sm:$0xff]
    %v254 = vld [vmem:[%s2 + $0x38] sm:$0xff]
    %vm255 = vcmask 31744
    %v257 = vsel %vm255, %v247, 0
    %v260 = vsel %vm255, %v248, 0
    %v263 = vsel %vm255, %v249, 0
    %v266 = vsel %vm255, %v250, 0
    %v269 = vsel %vm255, %v251, 0
    %v272 = vsel %vm255, %v252, 0
    %v275 = vsel %vm255, %v253, 0
    %v278 = vsel %vm255, %v254, 0
    %vm280 = vcmask 1043456
    %v282 = vsel %vm280, %v246, 0
    %284 = vmatpush.msra.mxu0 0.0
    %285 = vmatpush.msra.mxu0 0.0
    %286 = vmatpush.msra.mxu0 0.0
    %287 = vmatpush.msra.mxu0 0.0
    %288 = vmatpush.msra.mxu0 0.0
    %289 = vmatpush.msra.mxu0 0.0
    %290 = vmatpush.msra.mxu0 0.0
    %291 = vmatpush.msra.mxu0 0.0
    %292 = vmatpush.msra.mxu0 0.0
    %293 = vmatpush.msra.mxu0 0.0
    %294 = vmatpush.msra.mxu0 0.0
    %295 = vmatpush.msra.mxu0 0.0
    %296 = vmatpush.msra.mxu0 0.0
    %297 = vmatpush.msra.mxu0 0.0
    %298 = vmatpush.msra.mxu0 0.0
    %299 = vmatpush.msra.mxu0 %v282
    %300 = vmatmul.f32.gmra.mxu0 %v257
    %v301 = vpop.f32.mrf.mxu0
    %v302 = vadd.f32 0.0, %v301
    %303 = vmatmul.f32.gmra.mxu0 %v260
    %v304 = vpop.f32.mrf.mxu0
    %v305 = vadd.f32 0.0, %v304
    %306 = vmatmul.f32.gmra.mxu0 %v263
    %v307 = vpop.f32.mrf.mxu0
    %v308 = vadd.f32 0.0, %v307
    %309 = vmatmul.f32.gmra.mxu0 %v266
    %v310 = vpop.f32.mrf.mxu0
    %v311 = vadd.f32 0.0, %v310
    %312 = vmatmul.f32.gmra.mxu0 %v269
    %v313 = vpop.f32.mrf.mxu0
    %v314 = vadd.f32 0.0, %v313
    %315 = vmatmul.f32.gmra.mxu0 %v272
    %v316 = vpop.f32.mrf.mxu0
    %v317 = vadd.f32 0.0, %v316
    %318 = vmatmul.f32.gmra.mxu0 %v275
    %v319 = vpop.f32.mrf.mxu0
    %v320 = vadd.f32 0.0, %v319
    %321 = vmatmul.f32.gmra.mxu0 %v278
    %v322 = vpop.f32.mrf.mxu0
    %v323 = vadd.f32 0.0, %v322
    %324 = vdwg.mxu0
    %333 = vrot.lane.b32.xlu0 %v302, 126
    %v334 = vpop.permute.xlu0 %333
    %335 = vrot.lane.b32.xlu0 %v305, 126
    %v336 = vpop.permute.xlu0 %335
    %337 = vrot.lane.b32.xlu0 %v308, 126
    %v338 = vpop.permute.xlu0 %337
    %339 = vrot.lane.b32.xlu0 %v311, 126
    %v340 = vpop.permute.xlu0 %339
    %341 = vrot.lane.b32.xlu0 %v314, 126
    %v342 = vpop.permute.xlu0 %341
    %343 = vrot.lane.b32.xlu0 %v317, 126
    %v344 = vpop.permute.xlu0 %343
    %345 = vrot.lane.b32.xlu0 %v320, 126
    %v346 = vpop.permute.xlu0 %345
    %347 = vrot.lane.b32.xlu0 %v323, 126
    %v348 = vpop.permute.xlu0 %347
    %v357 = vadd.f32 %v302, %v334
    %v358 = vadd.f32 %v305, %v336
    %v359 = vadd.f32 %v308, %v338
    %v360 = vadd.f32 %v311, %v340
    %v361 = vadd.f32 %v314, %v342
    %v362 = vadd.f32 %v317, %v344
    %v363 = vadd.f32 %v320, %v346
    %v364 = vadd.f32 %v323, %v348
    %v365 = vxor.u32 %v357, 2147483648
    %v366 = vxor.u32 %v358, 2147483648
    %v367 = vxor.u32 %v359, 2147483648
    %v368 = vxor.u32 %v360, 2147483648
    %v369 = vxor.u32 %v361, 2147483648
    %v370 = vxor.u32 %v362, 2147483648
    %v371 = vxor.u32 %v363, 2147483648
    %v372 = vxor.u32 %v364, 2147483648
    %v373 = vmul.f32 %v365, 1.442695
    %v374 = vpow.pop %v373
    %v375 = vmul.f32 %v366, 1.442695
    %v376 = vpow.pop %v375
    %v377 = vmul.f32 %v367, 1.442695
    %v378 = vpow.pop %v377
    %v379 = vmul.f32 %v368, 1.442695
    %v380 = vpow.pop %v379
    %v381 = vmul.f32 %v369, 1.442695
    %v382 = vpow.pop %v381
    %v383 = vmul.f32 %v370, 1.442695
    %v384 = vpow.pop %v383
    %v385 = vmul.f32 %v371, 1.442695
    %v386 = vpow.pop %v385
    %v387 = vmul.f32 %v372, 1.442695
    %v388 = vpow.pop %v387
    %v389 = vadd.f32 %v374, 1.0
    %v390 = vadd.f32 %v376, 1.0
    %v391 = vadd.f32 %v378, 1.0
    %v392 = vadd.f32 %v380, 1.0
    %v393 = vadd.f32 %v382, 1.0
    %v394 = vadd.f32 %v384, 1.0
    %v395 = vadd.f32 %v386, 1.0
    %v396 = vadd.f32 %v388, 1.0
    %v397 = vrcp.pop %v389
    %v398 = vmul.f32 %v389, %v397
    %v399 = vsub.f32 1.0, %v398
    %v400 = vmul.f32 %v397, %v399
    %v401 = vadd.f32 %v397, %v400
    %vm402 = vweird.f32 %v389
    %vm403 = vweird.f32 %v397
    %vm404 = vmor %vm402, %vm403
    %v405 = vsel %vm404, %v397, %v401
    %v406 = vand.u32 2147483647, %v389
    %vm407 = vcmp.eq.f32.partialorder %v406, 8.507059e+37
    %v408 = vand.u32 %v389, 2147483648
    %v409 = vor.u32 1.1754944e-38, %v408
    %v410 = vsel %vm407, %v409, %v405
    %v411 = vmul.f32 1.0, %v410
    %v412 = vrcp.pop %v390
    %v413 = vmul.f32 %v390, %v412
    %v414 = vsub.f32 1.0, %v413
    %v415 = vmul.f32 %v412, %v414
    %v416 = vadd.f32 %v412, %v415
    %vm417 = vweird.f32 %v390
    %vm418 = vweird.f32 %v412
    %vm419 = vmor %vm417, %vm418
    %v420 = vsel %vm419, %v412, %v416
    %v421 = vand.u32 2147483647, %v390
    %vm422 = vcmp.eq.f32.partialorder %v421, 8.507059e+37
    %v423 = vand.u32 %v390, 2147483648
    %v424 = vor.u32 1.1754944e-38, %v423
    %v425 = vsel %vm422, %v424, %v420
    %v426 = vmul.f32 1.0, %v425
    %v427 = vrcp.pop %v391
    %v428 = vmul.f32 %v391, %v427
    %v429 = vsub.f32 1.0, %v428
    %v430 = vmul.f32 %v427, %v429
    %v431 = vadd.f32 %v427, %v430
    %vm432 = vweird.f32 %v391
    %vm433 = vweird.f32 %v427
    %vm434 = vmor %vm432, %vm433
    %v435 = vsel %vm434, %v427, %v431
    %v436 = vand.u32 2147483647, %v391
    %vm437 = vcmp.eq.f32.partialorder %v436, 8.507059e+37
    %v438 = vand.u32 %v391, 2147483648
    %v439 = vor.u32 1.1754944e-38, %v438
    %v440 = vsel %vm437, %v439, %v435
    %v441 = vmul.f32 1.0, %v440
    %v442 = vrcp.pop %v392
    %v443 = vmul.f32 %v392, %v442
    %v444 = vsub.f32 1.0, %v443
    %v445 = vmul.f32 %v442, %v444
    %v446 = vadd.f32 %v442, %v445
    %vm447 = vweird.f32 %v392
    %vm448 = vweird.f32 %v442
    %vm449 = vmor %vm447, %vm448
    %v450 = vsel %vm449, %v442, %v446
    %v451 = vand.u32 2147483647, %v392
    %vm452 = vcmp.eq.f32.partialorder %v451, 8.507059e+37
    %v453 = vand.u32 %v392, 2147483648
    %v454 = vor.u32 1.1754944e-38, %v453
    %v455 = vsel %vm452, %v454, %v450
    %v456 = vmul.f32 1.0, %v455
    %v457 = vrcp.pop %v393
    %v458 = vmul.f32 %v393, %v457
    %v459 = vsub.f32 1.0, %v458
    %v460 = vmul.f32 %v457, %v459
    %v461 = vadd.f32 %v457, %v460
    %vm462 = vweird.f32 %v393
    %vm463 = vweird.f32 %v457
    %vm464 = vmor %vm462, %vm463
    %v465 = vsel %vm464, %v457, %v461
    %v466 = vand.u32 2147483647, %v393
    %vm467 = vcmp.eq.f32.partialorder %v466, 8.507059e+37
    %v468 = vand.u32 %v393, 2147483648
    %v469 = vor.u32 1.1754944e-38, %v468
    %v470 = vsel %vm467, %v469, %v465
    %v471 = vmul.f32 1.0, %v470
    %v472 = vrcp.pop %v394
    %v473 = vmul.f32 %v394, %v472
    %v474 = vsub.f32 1.0, %v473
    %v475 = vmul.f32 %v472, %v474
    %v476 = vadd.f32 %v472, %v475
    %vm477 = vweird.f32 %v394
    %vm478 = vweird.f32 %v472
    %vm479 = vmor %vm477, %vm478
    %v480 = vsel %vm479, %v472, %v476
    %v481 = vand.u32 2147483647, %v394
    %vm482 = vcmp.eq.f32.partialorder %v481, 8.507059e+37
    %v483 = vand.u32 %v394, 2147483648
    %v484 = vor.u32 1.1754944e-38, %v483
    %v485 = vsel %vm482, %v484, %v480
    %v486 = vmul.f32 1.0, %v485
    %v487 = vrcp.pop %v395
    %v488 = vmul.f32 %v395, %v487
    %v489 = vsub.f32 1.0, %v488
    %v490 = vmul.f32 %v487, %v489
    %v491 = vadd.f32 %v487, %v490
    %vm492 = vweird.f32 %v395
    %vm493 = vweird.f32 %v487
    %vm494 = vmor %vm492, %vm493
    %v495 = vsel %vm494, %v487, %v491
    %v496 = vand.u32 2147483647, %v395
    %vm497 = vcmp.eq.f32.partialorder %v496, 8.507059e+37
    %v498 = vand.u32 %v395, 2147483648
    %v499 = vor.u32 1.1754944e-38, %v498
    %v500 = vsel %vm497, %v499, %v495
    %v501 = vmul.f32 1.0, %v500
    %v502 = vrcp.pop %v396
    %v503 = vmul.f32 %v396, %v502
    %v504 = vsub.f32 1.0, %v503
    %v505 = vmul.f32 %v502, %v504
    %v506 = vadd.f32 %v502, %v505
    %vm507 = vweird.f32 %v396
    %vm508 = vweird.f32 %v502
    %vm509 = vmor %vm507, %vm508
    %v510 = vsel %vm509, %v502, %v506
    %v511 = vand.u32 2147483647, %v396
    %vm512 = vcmp.eq.f32.partialorder %v511, 8.507059e+37
    %v513 = vand.u32 %v396, 2147483648
    %v514 = vor.u32 1.1754944e-38, %v513
    %v515 = vsel %vm512, %v514, %v510
    %v516 = vmul.f32 1.0, %v515
    %518 = vset.pattern.permute.xlu0 0
    %519 = vperm.xlu0 %518, %v411
    %v520 = vpop.permute.xlu0 %519
    %523 = vset.pattern.permute.xlu0 0
    %524 = vperm.xlu0 %523, %v426
    %v525 = vpop.permute.xlu0 %524
    %528 = vset.pattern.permute.xlu0 0
    %529 = vperm.xlu0 %528, %v441
    %v530 = vpop.permute.xlu0 %529
    %533 = vset.pattern.permute.xlu0 0
    %534 = vperm.xlu0 %533, %v456
    %v535 = vpop.permute.xlu0 %534
    %538 = vset.pattern.permute.xlu0 0
    %539 = vperm.xlu0 %538, %v471
    %v540 = vpop.permute.xlu0 %539
    %543 = vset.pattern.permute.xlu0 0
    %544 = vperm.xlu0 %543, %v486
    %v545 = vpop.permute.xlu0 %544
    %548 = vset.pattern.permute.xlu0 0
    %549 = vperm.xlu0 %548, %v501
    %v550 = vpop.permute.xlu0 %549
    %553 = vset.pattern.permute.xlu0 0
    %554 = vperm.xlu0 %553, %v516
    %v555 = vpop.permute.xlu0 %554
    %v557 = vmul.f32 %v33, %v520
    %v558 = vmul.f32 %v34, %v520
    %v559 = vmul.f32 %v35, %v525
    %v560 = vmul.f32 %v36, %v525
    %v561 = vmul.f32 %v37, %v530
    %v562 = vmul.f32 %v38, %v530
    %v563 = vmul.f32 %v39, %v535
    %v564 = vmul.f32 %v40, %v535
    %v565 = vmul.f32 %v41, %v540
    %v566 = vmul.f32 %v42, %v540
    %v567 = vmul.f32 %v43, %v545
    %v568 = vmul.f32 %v44, %v545
    %v569 = vmul.f32 %v45, %v550
    %v570 = vmul.f32 %v46, %v550
    %v571 = vmul.f32 %v47, %v555
    %v572 = vmul.f32 %v48, %v555
    %573 = vst [vmem:[#allocation5] sm:$0xff] %v557
    %574 = vst [vmem:[#allocation5 + $0x8] sm:$0xff] %v558
    %575 = vst [vmem:[#allocation5 + $0x10] sm:$0xff] %v559
    %576 = vst [vmem:[#allocation5 + $0x18] sm:$0xff] %v560
    %577 = vst [vmem:[#allocation5 + $0x20] sm:$0xff] %v561
    %578 = vst [vmem:[#allocation5 + $0x28] sm:$0xff] %v562
    %579 = vst [vmem:[#allocation5 + $0x30] sm:$0xff] %v563
    %580 = vst [vmem:[#allocation5 + $0x38] sm:$0xff] %v564
    %581 = vst [vmem:[#allocation5 + $0x40] sm:$0xff] %v565
    %582 = vst [vmem:[#allocation5 + $0x48] sm:$0xff] %v566
    %583 = vst [vmem:[#allocation5 + $0x50] sm:$0xff] %v567
    %584 = vst [vmem:[#allocation5 + $0x58] sm:$0xff] %v568
    %585 = vst [vmem:[#allocation5 + $0x60] sm:$0xff] %v569
    %586 = vst [vmem:[#allocation5 + $0x68] sm:$0xff] %v570
    %587 = vst [vmem:[#allocation5 + $0x70] sm:$0xff] %v571
    %588 = vst [vmem:[#allocation5 + $0x78] sm:$0xff] %v572
    %v589 = vld [vmem:[%s130] sm:$0xff]
    %v590 = vld [vmem:[%s130 + $0x8] sm:$0xff]
    %v591 = vld [vmem:[%s130 + $0x10] sm:$0xff]
    %v592 = vld [vmem:[%s130 + $0x18] sm:$0xff]
    %v593 = vld [vmem:[%s130 + $0x20] sm:$0xff]
    %v594 = vld [vmem:[%s130 + $0x28] sm:$0xff]
    %v595 = vld [vmem:[%s130 + $0x30] sm:$0xff]
    %v596 = vld [vmem:[%s130 + $0x38] sm:$0xff]
    %v597 = vld [vmem:[%s130 + $0x40] sm:$0xff]
    %v598 = vld [vmem:[%s130 + $0x48] sm:$0xff]
    %v599 = vld [vmem:[%s130 + $0x50] sm:$0xff]
    %v600 = vld [vmem:[%s130 + $0x58] sm:$0xff]
    %v601 = vld [vmem:[%s130 + $0x60] sm:$0xff]
    %v602 = vld [vmem:[%s130 + $0x68] sm:$0xff]
    %v603 = vld [vmem:[%s130 + $0x70] sm:$0xff]
    %v604 = vld [vmem:[%s130 + $0x78] sm:$0xff]
    %605 = vset.pattern.permute.xlu0 1
    %606 = vperm.xlu0 %605, %v411
    %v607 = vpop.permute.xlu0 %606
    %609 = vset.pattern.permute.xlu0 1
    %610 = vperm.xlu0 %609, %v426
    %v611 = vpop.permute.xlu0 %610
    %613 = vset.pattern.permute.xlu0 1
    %614 = vperm.xlu0 %613, %v441
    %v615 = vpop.permute.xlu0 %614
    %617 = vset.pattern.permute.xlu0 1
    %618 = vperm.xlu0 %617, %v456
    %v619 = vpop.permute.xlu0 %618
    %621 = vset.pattern.permute.xlu0 1
    %622 = vperm.xlu0 %621, %v471
    %v623 = vpop.permute.xlu0 %622
    %625 = vset.pattern.permute.xlu0 1
    %626 = vperm.xlu0 %625, %v486
    %v627 = vpop.permute.xlu0 %626
    %629 = vset.pattern.permute.xlu0 1
    %630 = vperm.xlu0 %629, %v501
    %v631 = vpop.permute.xlu0 %630
    %633 = vset.pattern.permute.xlu0 1
    %634 = vperm.xlu0 %633, %v516
    %v635 = vpop.permute.xlu0 %634
    %v637 = vmul.f32 %v589, %v607
    %v638 = vmul.f32 %v590, %v607
    %v639 = vmul.f32 %v591, %v611
    %v640 = vmul.f32 %v592, %v611
    %v641 = vmul.f32 %v593, %v615
    %v642 = vmul.f32 %v594, %v615
    %v643 = vmul.f32 %v595, %v619
    %v644 = vmul.f32 %v596, %v619
    %v645 = vmul.f32 %v597, %v623
    %v646 = vmul.f32 %v598, %v623
    %v647 = vmul.f32 %v599, %v627
    %v648 = vmul.f32 %v600, %v627
    %v649 = vmul.f32 %v601, %v631
    %v650 = vmul.f32 %v602, %v631
    %v651 = vmul.f32 %v603, %v635
    %v652 = vmul.f32 %v604, %v635
    %s653 = scalar_lea.vmem [#allocation5], 128
    %654 = vst [vmem:[%s653] sm:$0xff] %v637
    %655 = vst [vmem:[%s653 + $0x8] sm:$0xff] %v638
    %656 = vst [vmem:[%s653 + $0x10] sm:$0xff] %v639
    %657 = vst [vmem:[%s653 + $0x18] sm:$0xff] %v640
    %658 = vst [vmem:[%s653 + $0x20] sm:$0xff] %v641
    %659 = vst [vmem:[%s653 + $0x28] sm:$0xff] %v642
    %660 = vst [vmem:[%s653 + $0x30] sm:$0xff] %v643
    %661 = vst [vmem:[%s653 + $0x38] sm:$0xff] %v644
    %662 = vst [vmem:[%s653 + $0x40] sm:$0xff] %v645
    %663 = vst [vmem:[%s653 + $0x48] sm:$0xff] %v646
    %664 = vst [vmem:[%s653 + $0x50] sm:$0xff] %v647
    %665 = vst [vmem:[%s653 + $0x58] sm:$0xff] %v648
    %666 = vst [vmem:[%s653 + $0x60] sm:$0xff] %v649
    %667 = vst [vmem:[%s653 + $0x68] sm:$0xff] %v650
    %668 = vst [vmem:[%s653 + $0x70] sm:$0xff] %v651
    %669 = vst [vmem:[%s653 + $0x78] sm:$0xff] %v652
    // Predicated region
    $region18: #{tpu_custom_call.1} parent=1 // pred_check
      _
    $region19: #{tpu_custom_call.1} parent=1 // pred_check_branch
      %671 = sbr.rel (0) target = $region21
    $region20: #{tpu_custom_call.1} parent=1 // pred_region
      %673 = vsyncadd [#allocation4], 0
      %s674 = sshll.u32 [#allocation5], 4
      %s675 = int_to_ptr.vmem [resolvable:$true] %s674
      %s676 = sshll.u32 %s3, 4
      %s677 = int_to_ptr.hbm [resolvable:$true] %s676
      %682 = dma.vmem_to_hbm [thread:$0]  %s675, 4096, %s677, [#allocation4], 256, 256, 16
    $region21: #{tpu_custom_call.1} parent=1 // pred_fallthru
      _
    // Predicated region
    $region22: #{tpu_custom_call.1} parent=1 // pred_check
      _
    $region23: #{tpu_custom_call.1} parent=1 // pred_check_branch
      %684 = sbr.rel (0) target = $region25
    $region24: #{tpu_custom_call.1} parent=1 // pred_region
      %686 = dma.done [#allocation4], 4096
    $region25: #{tpu_custom_call.1} parent=1 // pred_fallthru
      _
    %687 = vsyncpa [#allocation3], 1
    %688 = vsyncpa [#allocation4], 1

</llo_original>
